<compile_context>
chip_gen: v5e
topology: v5e:2x2
jax: 0.10.0
libtpu: 0.0.40
codegen_flags: <defaults>
</compile_context>

<pallas_src>
import math

import jax
import jax.numpy as jnp
from jax.experimental import pallas as pl
from jax.experimental.pallas import tpu as pltpu


# ---------------------------------------------------------------------------
# shape helpers
# ---------------------------------------------------------------------------
def _resolve_shape(batch, numel_per_batch, shape):
    """Replicate torch.Tensor.view(...) inference of a single -1 dim."""
    shape = list(shape)
    if -1 in shape:
        idx = shape.index(-1)
        known = 1
        for i, s in enumerate(shape):
            if i != idx:
                known *= s
        assert known > 0 and numel_per_batch % known == 0, "cannot infer -1 dim"
        shape[idx] = numel_per_batch // known
    assert math.prod(shape) == numel_per_batch, "shape mismatch in Reshape"
    return (batch, *shape)


# ---------------------------------------------------------------------------
# primary path: zero-copy reshape (output aliases input)
# ---------------------------------------------------------------------------
def _alias_kernel(x_ref, o_ref):
    # Output aliases the input buffer (input_output_aliases={0: 0}), so every
    # byte of the output already holds the correct value.  Rewriting one small
    # aligned tile with the identical values it contains is enough to mark the
    # output as produced -- no full-array HBM round trip.
    o_ref[...] = x_ref[...]


def reshape_forward(x, *shape):
    """Pallas-backed equivalent of `Reshape(*shape)(x)` with no data copy.

    The output buffer aliases the input buffer; when the input is an
    intermediate (or donated) array the op costs ~one tile of HBM traffic.
    The shape change itself is metadata only.
    """
    b = x.shape[0]
    f = math.prod(x.shape[1:]) if x.ndim > 1 else 1
    out_shape = _resolve_shape(b, f, shape)
    itemsize = x.dtype.itemsize

    # Row-major flatten per batch: identical element order to torch's .view.
    x2d = x.reshape(b, f)

    # One small, always-legal tile: second-to-last dim is a multiple of 8 or
    # the full extent; last dim is a multiple of 128 or the full extent.
    tile_r = b if b < 8 else 8
    tile_c = f if f < 128 else 128

    y2d = pl.pallas_call(
        _alias_kernel,
        out_shape=jax.ShapeDtypeStruct((b, f), x.dtype),
        grid=(1,),
        in_specs=[pl.BlockSpec((tile_r, tile_c), lambda i: (0, 0))],
        out_specs=pl.BlockSpec((tile_r, tile_c), lambda i: (0, 0)),
        input_output_aliases={0: 0},
        cost_estimate=pl.CostEstimate(
            flops=0,
            transcendentals=0,
            bytes_accessed=2 * tile_r * tile_c * itemsize,
        ),
    )(x2d)

    # Final view to the requested target shape (free metadata change).
    return y2d.reshape(out_shape)


# ---------------------------------------------------------------------------
# materializing variant ("if a copy kernel must exist" path from the review)
# ---------------------------------------------------------------------------
def _copy_kernel(x_ref, o_ref):
    o_ref[...] = x_ref[...]


_LANE_CANDIDATES = (2048, 1024, 512, 256, 128)


def _slab_shape(total):
    """Factor `total` into (R, C) with C % 128 == 0, preferring R % 8 == 0."""
    if total % 128 == 0:
        for c in _LANE_CANDIDATES:
            if total % c == 0 and (total // c) % 8 == 0:
                return total // c, c
        for c in _LANE_CANDIDATES:
            if total % c == 0:
                return total // c, c
    return None


def _block_rows(rows, row_bytes, target_bytes=2 * 1024 * 1024):
    """Largest multiple-of-8 divisor of `rows` giving ~<=2 MiB blocks."""
    if rows % 8 != 0:
        return rows  # small / odd row count: single full-extent block
    max_rows = max(8, target_bytes // max(row_bytes, 1))
    best = 8
    r = 16
    while r <= min(rows, max_rows):
        if rows % r == 0:
            best = r
        r += 8
    return best


def reshape_copy_forward(x, *shape):
    """Same semantics as `reshape_forward` but returns a fresh buffer.

    Lane-dense (R, C % 128 == 0) slab tiling with 8-row-aligned ~2 MiB blocks:
    unmasked vld/vst, many pipelined grid steps for large arrays, bounded VMEM
    (4 x 2 MiB double-buffered in+out fits every generation's scoped limit).
    """
    b = x.shape[0]
    f = math.prod(x.shape[1:]) if x.ndim > 1 else 1
    out_shape = _resolve_shape(b, f, shape)
    total = b * f
    itemsize = x.dtype.itemsize

    slab = _slab_shape(total)
    if slab is None:
        # Odd element counts: fall back to (batch, features) full-width rows
        # (last block dim equals the array dim, so the spec stays legal).
        rows, cols = b, f
    else:
        rows, cols = slab

    block_r = _block_rows(rows, cols * itemsize)
    x2d = x.reshape(rows, cols)

    y2d = pl.pallas_call(
        _copy_kernel,
        out_shape=jax.ShapeDtypeStruct((rows, cols), x.dtype),
        grid=(pl.cdiv(rows, block_r),),
        in_specs=[pl.BlockSpec((block_r, cols), lambda i: (i, 0))],
        out_specs=pl.BlockSpec((block_r, cols), lambda i: (i, 0)),
        compiler_params=pltpu.CompilerParams(
            dimension_semantics=("parallel",),
            vmem_limit_bytes=32 * 1024 * 1024,
        ),
        cost_estimate=pl.CostEstimate(
            flops=0,
            transcendentals=0,
            bytes_accessed=2 * total * itemsize,
        ),
    )(x2d)

    return y2d.reshape(out_shape)


if __name__ == "__main__":
    key = jax.random.PRNGKey(0)
    # Small NCHW input, consistent with the module's docstring-style usage.
    x = jax.random.normal(key, (2, 4, 16, 16), dtype=jnp.float32)

    # Reshape(-1): (2, 4, 16, 16) -> (2, 1024)   [zero-copy, aliased output]
    y = jax.block_until_ready(reshape_forward(x, -1))
    assert y.shape == (2, 1024)
    assert jnp.array_equal(y, x.reshape(2, -1))

    # Reshape(4, 16, 16): (2, 1024) -> (2, 4, 16, 16)
    z = jax.block_until_ready(reshape_forward(y, 4, 16, 16))
    assert z.shape == (2, 4, 16, 16)
    assert jnp.array_equal(z, x)

    # Materializing variant (review's "if a copy kernel must exist" tiling).
    yc = jax.block_until_ready(reshape_copy_forward(x, -1))
    assert yc.shape == (2, 1024)
    assert jnp.array_equal(yc, x.reshape(2, -1))

    zc = jax.block_until_ready(reshape_copy_forward(yc, 4, 16, 16))
    assert zc.shape == (2, 4, 16, 16)
    assert jnp.array_equal(zc, x)

    print("KERNEL_OK")
</pallas_src>

<mosaic_0001>
module attributes {stable_mosaic.version = 11 : i64} {
  func.func @_alias_kernel(%arg0: i32, %arg1: memref<2x128xf32, #tpu.memory_space<vmem>>, %arg2: memref<2x128xf32, #tpu.memory_space<vmem>>) attributes {dimension_semantics = [#tpu.dimension_semantics<arbitrary>], iteration_bounds = array<i64: 1>, scalar_prefetch = 0 : i64, scratch_operands = 0 : i64, tpu.core_type = #tpu.core_type<tc>, window_params = [{transform_indices = @transform_0, window_bounds = array<i64: 2, 128>}, {transform_indices = @transform_1, window_bounds = array<i64: 2, 128>}]} {
    %c0 = arith.constant 0 : index
    %c0_0 = arith.constant 0 : index
    %0 = vector.load %arg1[%c0, %c0_0] : memref<2x128xf32, #tpu.memory_space<vmem>>, vector<2x128xf32>
    %c0_1 = arith.constant 0 : index
    %c0_2 = arith.constant 0 : index
    %1 = vector.load %arg2[%c0_1, %c0_2] : memref<2x128xf32, #tpu.memory_space<vmem>>, vector<2x128xf32>
    tpu.vector_store %arg2[%c0_1, %c0_2], %0 {strides = array<i32>} : memref<2x128xf32, #tpu.memory_space<vmem>>, vector<2x128xf32>,
    return
  }
  func.func @transform_0(%arg0: i32) -> (i32, i32) {
    %c0_i32 = arith.constant 0 : i32
    %c0_i32_0 = arith.constant 0 : i32
    %c0_i32_1 = arith.constant 0 : i32
    return %c0_i32, %c0_i32_0 : i32, i32
  }
  func.func @transform_1(%arg0: i32) -> (i32, i32) {
    %c0_i32 = arith.constant 0 : i32
    %c0_i32_0 = arith.constant 0 : i32
    %c0_i32_1 = arith.constant 0 : i32
    return %c0_i32, %c0_i32_0 : i32, i32
  }
}

</mosaic_0001>

<llo_original>
// kernel: tpu_custom_call.1
$region0: #{tpu_custom_call.1}
  #allocation0 [shape = 'u32[]', space=smem, size = 0x4, offset = 0x4, fixed_abs, tag = 'smem constant byte address 0x4 - core index']
  #allocation1 [shape = 'u32[72,128]{1,0:T(1,128)}', space=vmem, size = 0x9000, scoped, tag = 'internal scratch']
  %s0 = inlined_call_operand.hbm [shape: f32[2,1024], index: 0, kind: input, shape index: {}, may-alias: {0,1}]
  %s1 = inlined_call_operand.hbm [shape: f32[2,1024], index: 1, kind: output, shape index: {}, may-alias: {0,1}]
  %s2 = sld [smem:[#allocation0]]
  $region18: #{tpu_custom_call.1} parent=0
    _
  %s4 = ssub.s32 1, %s2
  %s5 = scalar_select 0, %s4, %s2
  $region1: #{tpu_custom_call.1} parent=0
    #allocation2 [shape = 'u8[1024]{0}', space=vmem, size = 0x400, scoped, tag = 'input window, operand 0, single buffered']
    #allocation3 [shape = 's32[1]{0}', space=sflag, size = 0x4, scoped, tag = 'scoped memory for tpu_custom_call.1']
    #allocation4 [shape = 's32[1]{0}', space=sflag, size = 0x4, scoped, tag = 'scoped memory for tpu_custom_call.1']
    #allocation5 [shape = 'u8[1024]{0}', space=vmem, size = 0x400, scoped, tag = 'output window, operand 0, single buffered']
    %6 = vsyncpa [#allocation3], 0
    %7 = vsyncpa [#allocation4], 0
    // Predicated region
    $region2: #{tpu_custom_call.1} parent=1 // pred_check
      _
    $region3: #{tpu_custom_call.1} parent=1 // pred_check_branch
      %9 = sbr.rel (0) target = $region5
    $region4: #{tpu_custom_call.1} parent=1 // pred_region
      %11 = vsyncadd [#allocation3], 0
      %s13 = sshll.u32 %s0, 4
      %s14 = int_to_ptr.hbm [resolvable:$true] %s13
      %s15 = sshll.u32 [#allocation2], 4
      %s16 = int_to_ptr.vmem [resolvable:$true] %s15
      %18 = dma.hbm_to_vmem [thread:$0]  %s14, 32, %s16, [#allocation3]
    $region5: #{tpu_custom_call.1} parent=1 // pred_fallthru
      _
    // Predicated region
    $region6: #{tpu_custom_call.1} parent=1 // pred_check
      _
    $region7: #{tpu_custom_call.1} parent=1 // pred_check_branch
      %20 = sbr.rel (0) target = $region9
    $region8: #{tpu_custom_call.1} parent=1 // pred_region
      %22 = dma.done [#allocation3], 32
    $region9: #{tpu_custom_call.1} parent=1 // pred_fallthru
      _
    %v23 = vld [vmem:[#allocation2] sm:$0x3]
    %24 = vst [vmem:[#allocation5] sm:$0x3] %v23
    // Predicated region
    $region10: #{tpu_custom_call.1} parent=1 // pred_check
      _
    $region11: #{tpu_custom_call.1} parent=1 // pred_check_branch
      %26 = sbr.rel (0) target = $region13
    $region12: #{tpu_custom_call.1} parent=1 // pred_region
      %28 = vsyncadd [#allocation4], 0
      %s30 = sshll.u32 [#allocation5], 4
      %s31 = int_to_ptr.vmem [resolvable:$true] %s30
      %s32 = sshll.u32 %s1, 4
      %s33 = int_to_ptr.hbm [resolvable:$true] %s32
      %35 = dma.vmem_to_hbm [thread:$0]  %s31, 32, %s33, [#allocation4]
    $region13: #{tpu_custom_call.1} parent=1 // pred_fallthru
      _
    // Predicated region
    $region14: #{tpu_custom_call.1} parent=1 // pred_check
      _
    $region15: #{tpu_custom_call.1} parent=1 // pred_check_branch
      %37 = sbr.rel (0) target = $region17
    $region16: #{tpu_custom_call.1} parent=1 // pred_region
      %39 = dma.done [#allocation4], 32
    $region17: #{tpu_custom_call.1} parent=1 // pred_fallthru
      _
    %40 = vsyncpa [#allocation3], 1
    %41 = vsyncpa [#allocation4], 1

</llo_original>
